<compile_context>
chip_gen: v7x
topology: tpu7x:2x2x1
jax: 0.10.0
libtpu: 0.0.40
codegen_flags: <defaults>
</compile_context>

<pallas_src>
import functools

import jax
import jax.numpy as jnp
from jax.experimental import pallas as pl
from jax.experimental.pallas import tpu as pltpu


def _apply_activation(x, activation: str):
    a = activation.lower()
    if a == "relu":
        return jnp.maximum(x, 0.0)
    if a == "elu":
        return jnp.where(x > 0, x, jnp.expm1(x))
    if a == "selu":
        alpha = 1.6732632423543772848170429916717
        scale = 1.0507009873554804934193349852946
        return scale * jnp.where(x > 0, x, alpha * jnp.expm1(x))
    if a == "gelu":
        # torch.nn.GELU() default = exact (erf-based) gelu
        return jax.nn.gelu(x, approximate=False)
    raise ValueError(
        "The activation must have one of the following string: relu, elu, selu, gelu"
    )


def _map_kernel(x_ref, wm_ref, wv_ref, bm_ref, bv_ref, mean_ref, logvar_ref,
                *, use_activation: bool, activation: str):
    # x_ref:            (D, tn)  channels on sublanes, spatial tile on lanes.
    # wm_ref / wv_ref:  (D, D)   mean / log_var halves of the 1x1 conv weight.
    # bm_ref / bv_ref:  (D, 1)
    # mean_ref/logvar_ref: (D, tn)  lane-dense output stores.
    x = x_ref[...]
    if use_activation:
        if x.dtype != jnp.float32:          # no redundant cast when already f32
            x = x.astype(jnp.float32)
        x = _apply_activation(x, activation)

    mean = jnp.dot(wm_ref[...], x, preferred_element_type=jnp.float32)
    logv = jnp.dot(wv_ref[...], x, preferred_element_type=jnp.float32)
    mean = mean + bm_ref[...].astype(jnp.float32)
    logv = logv + bv_ref[...].astype(jnp.float32)

    mean_ref[...] = mean.astype(mean_ref.dtype)
    logvar_ref[...] = logv.astype(logvar_ref.dtype)


def _round_up(x: int, m: int) -> int:
    return ((x + m - 1) // m) * m


def map_to_distribution_parameters_with_convolution(
    x, weight, bias, *, use_activation: bool = False, activation: str = "elu",
    tn: int = 512,
):
    """x: (B, D, H, W) NCHW.  weight: (2D, D, 1, 1) torch Conv2d layout.
    bias: (2D,).  Returns (mean, log_var), each (B, D, H, W)."""
    B, D, H, W = x.shape
    D2 = weight.shape[0]
    assert D2 == 2 * D and weight.shape[1] == D

    HW = H * W
    # Spatial (lane) tile: multiple of 128, no larger than the padded spatial dim.
    tn = max(128, _round_up(tn, 128))
    tn = min(tn, _round_up(HW, 128))
    HW_pad = _round_up(HW, tn)
    num_tiles = HW_pad // tn

    # Glue: (B, D, H, W) -> (B, D, HW) is a free reshape (no transpose).
    x_flat = x.reshape(B, D, HW)
    if HW_pad != HW:
        # Remainder handled by zero padding (act(0) == 0 for relu/elu/selu/gelu);
        # padded columns are sliced off after the kernel.
        x_flat = jnp.pad(x_flat, ((0, 0), (0, 0), (0, HW_pad - HW)))

    w2 = weight.reshape(D2, D)
    w_mean, w_logvar = w2[:D], w2[D:]
    b_mean = bias[:D].reshape(D, 1)
    b_logvar = bias[D:].reshape(D, 1)

    kernel = functools.partial(
        _map_kernel, use_activation=use_activation, activation=activation
    )

    # Explicit VMEM budget: double-buffered x tile + two output tiles, plus the
    # (small, double-buffered) weights/biases.  Kept well under v7x's 64 MiB
    # physical VMEM; raised above v5e's 16 MiB scoped default for big tiles.
    # NOTE: weight/bias re-fetch is elided by their constant index_map; the
    # second buffer they cost is negligible vs this budget.
    itemsize = jnp.dtype(x.dtype).itemsize
    block_bytes = 3 * D * tn * itemsize                      # x + mean + log_var tiles
    w_bytes = 2 * D * D * jnp.dtype(w2.dtype).itemsize \
        + 2 * D * jnp.dtype(bias.dtype).itemsize
    vmem_limit = int(min(100 * 2**20,
                         max(32 * 2**20, 3 * (2 * block_bytes + 2 * w_bytes))))

    cost = pl.CostEstimate(
        flops=2 * B * HW * D * D2,
        transcendentals=(B * HW * D)
        if (use_activation and activation.lower() != "relu") else 0,
        bytes_accessed=(3 * B * D * HW + D2 * D + D2) * itemsize,
    )

    out_struct = jax.ShapeDtypeStruct((B, D, HW_pad), x.dtype)
    mean_flat, logvar_flat = pl.pallas_call(
        kernel,
        out_shape=(out_struct, out_struct),
        grid_spec=pltpu.PrefetchScalarGridSpec(
            num_scalar_prefetch=0,
            grid=(B, num_tiles),
            in_specs=[
                pl.BlockSpec((None, D, tn), lambda b, j: (b, 0, j)),  # x tile
                pl.BlockSpec((D, D), lambda b, j: (0, 0)),            # W_mean
                pl.BlockSpec((D, D), lambda b, j: (0, 0)),            # W_logvar
                pl.BlockSpec((D, 1), lambda b, j: (0, 0)),            # b_mean
                pl.BlockSpec((D, 1), lambda b, j: (0, 0)),            # b_logvar
            ],
            out_specs=(
                pl.BlockSpec((None, D, tn), lambda b, j: (b, 0, j)),  # mean
                pl.BlockSpec((None, D, tn), lambda b, j: (b, 0, j)),  # log_var
            ),
        ),
        compiler_params=pltpu.CompilerParams(
            dimension_semantics=("parallel", "parallel"),
            vmem_limit_bytes=vmem_limit,
        ),
        cost_estimate=cost,
    )(x_flat, w_mean, w_logvar, b_mean, b_logvar)

    mean = mean_flat[:, :, :HW].reshape(B, D, H, W)
    log_var = logvar_flat[:, :, :HW].reshape(B, D, H, W)
    return mean, log_var


if __name__ == "__main__":
    B, D, H, W = 2, 4, 16, 16
    key = jax.random.PRNGKey(0)
    kx, kw, kb = jax.random.split(key, 3)

    x = jax.random.normal(kx, (B, D, H, W), dtype=jnp.float32)

    # Deterministic Conv2d(D, 2D, 1) parameter init (kaiming-uniform-like bounds).
    fan_in = D * 1 * 1
    bound = 1.0 / (fan_in ** 0.5)
    weight = jax.random.uniform(kw, (2 * D, D, 1, 1),
                                minval=-bound, maxval=bound, dtype=jnp.float32)
    bias = jax.random.uniform(kb, (2 * D,),
                              minval=-bound, maxval=bound, dtype=jnp.float32)

    w2 = weight.reshape(2 * D, D)

    # --- default module config: use_activation=False (Identity) ---
    mean, log_var = map_to_distribution_parameters_with_convolution(
        x, weight, bias, use_activation=False, activation="elu"
    )
    jax.block_until_ready((mean, log_var))

    ref = jnp.einsum("bdhw,od->bohw", x, w2) + bias.reshape(1, 2 * D, 1, 1)
    assert jnp.allclose(mean, ref[:, :D], atol=1e-5), "mean mismatch"
    assert jnp.allclose(log_var, ref[:, D:], atol=1e-5), "log_var mismatch"
    assert mean.shape == (B, D, H, W) and log_var.shape == (B, D, H, W)

    # --- activation path (elu) ---
    mean_a, log_var_a = map_to_distribution_parameters_with_convolution(
        x, weight, bias, use_activation=True, activation="elu"
    )
    jax.block_until_ready((mean_a, log_var_a))

    x_act = jnp.where(x > 0, x, jnp.expm1(x))
    ref_a = jnp.einsum("bdhw,od->bohw", x_act, w2) + bias.reshape(1, 2 * D, 1, 1)
    assert jnp.allclose(mean_a, ref_a[:, :D], atol=1e-5), "mean (elu) mismatch"
    assert jnp.allclose(log_var_a, ref_a[:, D:], atol=1e-5), "log_var (elu) mismatch"

    print("KERNEL_OK")
</pallas_src>

<mosaic_0001>
module attributes {stable_mosaic.version = 11 : i64} {
  func.func @_map_kernel(%arg0: i32, %arg1: i32, %arg2: memref<1x4x256xf32, #tpu.memory_space<vmem>>, %arg3: memref<4x4xf32, #tpu.memory_space<vmem>>, %arg4: memref<4x4xf32, #tpu.memory_space<vmem>>, %arg5: memref<4x1xf32, #tpu.memory_space<vmem>>, %arg6: memref<4x1xf32, #tpu.memory_space<vmem>>, %arg7: memref<1x4x256xf32, #tpu.memory_space<vmem>>, %arg8: memref<1x4x256xf32, #tpu.memory_space<vmem>>) attributes {dimension_semantics = [#tpu.dimension_semantics<parallel>, #tpu.dimension_semantics<parallel>], iteration_bounds = array<i64: 2, 1>, scalar_prefetch = 0 : i64, scratch_operands = 0 : i64, tpu.core_type = #tpu.core_type<tc>, window_params = [{transform_indices = @transform_0, window_bounds = array<i64: 1, 4, 256>}, {pipeline_mode = #tpu.pipeline_mode<synchronous>, transform_indices = @transform_1, window_bounds = array<i64: 4, 4>}, {pipeline_mode = #tpu.pipeline_mode<synchronous>, transform_indices = @transform_2, window_bounds = array<i64: 4, 4>}, {pipeline_mode = #tpu.pipeline_mode<synchronous>, transform_indices = @transform_3, window_bounds = array<i64: 4, 1>}, {pipeline_mode = #tpu.pipeline_mode<synchronous>, transform_indices = @transform_4, window_bounds = array<i64: 4, 1>}, {transform_indices = @transform_5, window_bounds = array<i64: 1, 4, 256>}, {transform_indices = @transform_6, window_bounds = array<i64: 1, 4, 256>}]} {
    %c0 = arith.constant 0 : index
    %c0_0 = arith.constant 0 : index
    %c0_1 = arith.constant 0 : index
    %0 = vector.load %arg2[%c0, %c0_0, %c0_1] : memref<1x4x256xf32, #tpu.memory_space<vmem>>, vector<1x4x256xf32>
    %1 = vector.shape_cast %0 : vector<1x4x256xf32> to vector<4x256xf32>
    %c0_2 = arith.constant 0 : index
    %c0_3 = arith.constant 0 : index
    %2 = vector.load %arg3[%c0_2, %c0_3] : memref<4x4xf32, #tpu.memory_space<vmem>>, vector<4x4xf32>
    %cst = arith.constant dense<0.000000e+00> : vector<4x256xf32>
    %3 = tpu.matmul %2, %1, %cst {dimension_numbers = #tpu.dot_dimension_numbers<[1], [0], [0], [1], [0, 0, 1, 1], [], []>} : vector<4x4xf32>, vector<4x256xf32>, vector<4x256xf32> -> vector<4x256xf32>
    %c0_4 = arith.constant 0 : index
    %c0_5 = arith.constant 0 : index
    %4 = vector.load %arg4[%c0_4, %c0_5] : memref<4x4xf32, #tpu.memory_space<vmem>>, vector<4x4xf32>
    %cst_6 = arith.constant dense<0.000000e+00> : vector<4x256xf32>
    %5 = tpu.matmul %4, %1, %cst_6 {dimension_numbers = #tpu.dot_dimension_numbers<[1], [0], [0], [1], [0, 0, 1, 1], [], []>} : vector<4x4xf32>, vector<4x256xf32>, vector<4x256xf32> -> vector<4x256xf32>
    %c0_7 = arith.constant 0 : index
    %c0_8 = arith.constant 0 : index
    %6 = vector.load %arg5[%c0_7, %c0_8] : memref<4x1xf32, #tpu.memory_space<vmem>>, vector<4x1xf32>
    %7 = vector.broadcast %6 : vector<4x1xf32> to vector<4x256xf32>
    %8 = arith.addf %3, %7 : vector<4x256xf32>
    %c0_9 = arith.constant 0 : index
    %c0_10 = arith.constant 0 : index
    %9 = vector.load %arg6[%c0_9, %c0_10] : memref<4x1xf32, #tpu.memory_space<vmem>>, vector<4x1xf32>
    %10 = vector.broadcast %9 : vector<4x1xf32> to vector<4x256xf32>
    %11 = arith.addf %5, %10 : vector<4x256xf32>
    %c0_11 = arith.constant 0 : index
    %c0_12 = arith.constant 0 : index
    %c0_13 = arith.constant 0 : index
    %12 = vector.load %arg7[%c0_11, %c0_12, %c0_13] : memref<1x4x256xf32, #tpu.memory_space<vmem>>, vector<1x4x256xf32>
    %13 = vector.shape_cast %12 : vector<1x4x256xf32> to vector<4x256xf32>
    %14 = vector.shape_cast %8 : vector<4x256xf32> to vector<1x4x256xf32>
    tpu.vector_store %arg7[%c0_11, %c0_12, %c0_13], %14 {strides = array<i32>} : memref<1x4x256xf32, #tpu.memory_space<vmem>>, vector<1x4x256xf32>,
    %c0_14 = arith.constant 0 : index
    %c0_15 = arith.constant 0 : index
    %c0_16 = arith.constant 0 : index
    %15 = vector.load %arg8[%c0_14, %c0_15, %c0_16] : memref<1x4x256xf32, #tpu.memory_space<vmem>>, vector<1x4x256xf32>
    %16 = vector.shape_cast %15 : vector<1x4x256xf32> to vector<4x256xf32>
    %17 = vector.shape_cast %11 : vector<4x256xf32> to vector<1x4x256xf32>
    tpu.vector_store %arg8[%c0_14, %c0_15, %c0_16], %17 {strides = array<i32>} : memref<1x4x256xf32, #tpu.memory_space<vmem>>, vector<1x4x256xf32>,
    return
  }
  func.func @transform_0(%arg0: i32, %arg1: i32) -> (i32, i32, i32) {
    %c0_i32 = arith.constant 0 : i32
    %c0_i32_0 = arith.constant 0 : i32
    return %arg0, %c0_i32, %arg1 : i32, i32, i32
  }
  func.func @transform_1(%arg0: i32, %arg1: i32) -> (i32, i32) {
    %c0_i32 = arith.constant 0 : i32
    %c0_i32_0 = arith.constant 0 : i32
    %c0_i32_1 = arith.constant 0 : i32
    return %c0_i32, %c0_i32_0 : i32, i32
  }
  func.func @transform_2(%arg0: i32, %arg1: i32) -> (i32, i32) {
    %c0_i32 = arith.constant 0 : i32
    %c0_i32_0 = arith.constant 0 : i32
    %c0_i32_1 = arith.constant 0 : i32
    return %c0_i32, %c0_i32_0 : i32, i32
  }
  func.func @transform_3(%arg0: i32, %arg1: i32) -> (i32, i32) {
    %c0_i32 = arith.constant 0 : i32
    %c0_i32_0 = arith.constant 0 : i32
    %c0_i32_1 = arith.constant 0 : i32
    return %c0_i32, %c0_i32_0 : i32, i32
  }
  func.func @transform_4(%arg0: i32, %arg1: i32) -> (i32, i32) {
    %c0_i32 = arith.constant 0 : i32
    %c0_i32_0 = arith.constant 0 : i32
    %c0_i32_1 = arith.constant 0 : i32
    return %c0_i32, %c0_i32_0 : i32, i32
  }
  func.func @transform_5(%arg0: i32, %arg1: i32) -> (i32, i32, i32) {
    %c0_i32 = arith.constant 0 : i32
    %c0_i32_0 = arith.constant 0 : i32
    return %arg0, %c0_i32, %arg1 : i32, i32, i32
  }
  func.func @transform_6(%arg0: i32, %arg1: i32) -> (i32, i32, i32) {
    %c0_i32 = arith.constant 0 : i32
    %c0_i32_0 = arith.constant 0 : i32
    return %arg0, %c0_i32, %arg1 : i32, i32, i32
  }
}

</mosaic_0001>

<llo_original>
// kernel: tpu_custom_call.1
$region0: #{tpu_custom_call.1}
  #allocation0 [shape = 'u32[]', space=smem, size = 0x4, offset = 0x4, fixed_abs, tag = 'smem constant byte address 0x4 - core index']
  #allocation1 [shape = 'u32[144,128]{1,0:T(1,128)}', space=vmem, size = 0x12000, scoped, tag = 'internal scratch']
  %s0 = inlined_call_operand.hbm [shape: f32[2,4,256], index: 0, kind: input, shape index: {}]
  %s1 = inlined_call_operand.vmem [shape: f32[4,4], index: 1, kind: input, shape index: {}]
  %s2 = inlined_call_operand.vmem [shape: f32[4,4], index: 2, kind: input, shape index: {}]
  %s3 = inlined_call_operand.vmem [shape: f32[4,1], index: 3, kind: input, shape index: {}]
  %s4 = inlined_call_operand.vmem [shape: f32[4,1], index: 4, kind: input, shape index: {}]
  %s5 = inlined_call_operand.hbm [shape: f32[2,4,256], index: 5, kind: output, shape index: {0}]
  %s6 = inlined_call_operand.hbm [shape: f32[2,4,256], index: 6, kind: output, shape index: {1}]
  %7 = xla_tuple %s5, %s6
  %s8 = sld [smem:[#allocation0]]
  $region65: #{tpu_custom_call.1} parent=0
    _
  %s10 = ssub.s32 1, %s8
  %s11 = scalar_select 0, %s10, %s8
  $region1: #{tpu_custom_call.1} parent=0
    #allocation2 [shape = 'u8[8192]{0}', space=vmem, size = 0x2000, scoped, tag = 'input window, operand 0']
    #allocation3 [shape = 's32[2]{0}', space=sflag, size = 0x8, scoped, tag = 'scoped memory for tpu_custom_call.1']
    #allocation4 [shape = 's32[2]{0}', space=sflag, size = 0x8, scoped, tag = 'scoped memory for tpu_custom_call.1']
    #allocation5 [shape = 'u8[8192]{0}', space=vmem, size = 0x2000, scoped, tag = 'output window, operand 0']
    #allocation6 [shape = 'u8[8192]{0}', space=vmem, size = 0x2000, scoped, tag = 'output window, operand 1']
    #allocation7 [shape = 's32[2]{0}', space=sflag, size = 0x8, scoped, tag = 'scoped memory for tpu_custom_call.1']
    %12 = vsyncpa [#allocation3], 0
    %s13 = scalar_lea.sflag [#allocation3], 1
    %14 = vsyncpa %s13, 0
    %15 = vsyncpa [#allocation4], 0
    %s16 = scalar_lea.sflag [#allocation4], 1
    %17 = vsyncpa %s16, 0
    %18 = vsyncpa [#allocation7], 0
    %s19 = scalar_lea.sflag [#allocation7], 1
    %20 = vsyncpa %s19, 0
    loop: start=0, step=1, limit=4
    $region2: #{tpu_custom_call.1} parent=1 // loop_pre_header
      _
    $region3: #{tpu_custom_call.1} parent=1 // loop_header
      %s22 = sphi 0, %s26
      %p23 = scmp.ge.s32.totalorder %s22, 4
      %s29 = sphi 0, %s41
      %s30 = sphi 0, %s37
      %s31 = sphi 0, %s29
      %s32 = sphi 0, %s30
      %s33 = sphi 0, %s31
      %s34 = sphi 0, %s32
      %s46 = sphi 0, %s48
      %s49 = sphi 0, %s46
      %s50 = sphi 0, %s49
      %s66 = sphi 0, %s50
      %s70 = sphi 0, %s70
      %s72 = sphi 0, %s70
      %s73 = sphi 0, %s72
      %s87 = sphi 0, %s73
      %s91 = sphi 0, %s91
      %s93 = sphi 0, %s91
      %s94 = sphi 0, %s93
      %s108 = sphi 0, %s94
      %s112 = sphi 0, %s112
      %s114 = sphi 0, %s112
      %s115 = sphi 0, %s114
      %s129 = sphi 0, %s115
      %s133 = sphi 0, %s133
      %s135 = sphi 0, %s133
      %s136 = sphi 0, %s135
      %s150 = sphi 0, %s136
      %s158 = sphi 0, %s160
      %s161 = sphi 0, %s158
      %s162 = sphi 0, %s161
      %s178 = sphi 0, %s162
      %s186 = sphi 0, %s188
      %s189 = sphi 0, %s186
      %s190 = sphi 0, %s189
      %s206 = sphi 0, %s190
    $region4: #{tpu_custom_call.1} parent=1 // loop_header_branch
      %25 = sbr.rel (%p23) target = $region8
    $region5: #{tpu_custom_call.1} parent=1 // loop_body
      %s27 = ssub.s32 %s22, 1
      %s28 = ssub.s32 %s22, 2
      %s35 = sadd.s32 1, %s30
      %p36 = scmp.ge.s32.totalorder %s35, 1
      %s37 = scalar_select %p36, 0, %s35
      %s38 = sadd.s32 1, %s29
      %s39 = scalar_select %p36, %s38, %s29
      %p40 = scmp.ge.s32.totalorder %s39, 2
      %s41 = scalar_select %p40, 0, %s39
      %s42 = ssub.s32 %s29, %s41
      %s43 = ssub.s32 %s30, %s37
      %s44 = sor.u32 %s42, %s43
      %p45 = scmp.eq.s32.totalorder %s44, 0
      %s47 = sadd.s32 %s46, 1
      %s48 = scalar_select %p45, %s46, %s47
      %p51 = pneg %p45
      %p52 = scmp.eq.s32.totalorder %s22, 1
      %p53 = por %p51, %p52
      %p54 = scmp.ne.s32.totalorder %s46, %s49
      %p55 = scmp.eq.s32.totalorder %s22, 0
      %p56 = por %p54, %p55
      %p57 = scmp.ne.s32.totalorder %s46, %s49
      %p58 = scmp.eq.s32.totalorder %s27, 1
      %p59 = por %p57, %p58
      %p60 = scmp.ne.s32.totalorder %s49, %s50
      %p61 = scmp.eq.s32.totalorder %s27, 0
      %p62 = por %p60, %p61
      %p63 = scmp.ne.s32.totalorder %s49, %s50
      %p64 = scmp.eq.s32.totalorder %s28, 1
      %p65 = por %p63, %p64
      %p67 = scmp.ne.s32.totalorder %s50, %s66
      %p68 = scmp.eq.s32.totalorder %s28, 0
      %p69 = por %p67, %p68
      %s71 = sadd.s32 %s70, 1
      %p74 = scmp.eq.s32.totalorder %s22, 1
      %p75 = scmp.ne.s32.totalorder %s70, %s72
      %p76 = scmp.eq.s32.totalorder %s22, 0
      %p77 = por %p75, %p76
      %p78 = scmp.ne.s32.totalorder %s70, %s72
      %p79 = scmp.eq.s32.totalorder %s27, 1
      %p80 = por %p78, %p79
      %p81 = scmp.ne.s32.totalorder %s72, %s73
      %p82 = scmp.eq.s32.totalorder %s27, 0
      %p83 = por %p81, %p82
      %p84 = scmp.ne.s32.totalorder %s72, %s73
      %p85 = scmp.eq.s32.totalorder %s28, 1
      %p86 = por %p84, %p85
      %p88 = scmp.ne.s32.totalorder %s73, %s87
      %p89 = scmp.eq.s32.totalorder %s28, 0
      %p90 = por %p88, %p89
      %s92 = sadd.s32 %s91, 1
      %p95 = scmp.eq.s32.totalorder %s22, 1
      %p96 = scmp.ne.s32.totalorder %s91, %s93
      %p97 = scmp.eq.s32.totalorder %s22, 0
      %p98 = por %p96, %p97
      %p99 = scmp.ne.s32.totalorder %s91, %s93
      %p100 = scmp.eq.s32.totalorder %s27, 1
      %p101 = por %p99, %p100
      %p102 = scmp.ne.s32.totalorder %s93, %s94
      %p103 = scmp.eq.s32.totalorder %s27, 0
      %p104 = por %p102, %p103
      %p105 = scmp.ne.s32.totalorder %s93, %s94
      %p106 = scmp.eq.s32.totalorder %s28, 1
      %p107 = por %p105, %p106
      %p109 = scmp.ne.s32.totalorder %s94, %s108
      %p110 = scmp.eq.s32.totalorder %s28, 0
      %p111 = por %p109, %p110
      %s113 = sadd.s32 %s112, 1
      %p116 = scmp.eq.s32.totalorder %s22, 1
      %p117 = scmp.ne.s32.totalorder %s112, %s114
      %p118 = scmp.eq.s32.totalorder %s22, 0
      %p119 = por %p117, %p118
      %p120 = scmp.ne.s32.totalorder %s112, %s114
      %p121 = scmp.eq.s32.totalorder %s27, 1
      %p122 = por %p120, %p121
      %p123 = scmp.ne.s32.totalorder %s114, %s115
      %p124 = scmp.eq.s32.totalorder %s27, 0
      %p125 = por %p123, %p124
      %p126 = scmp.ne.s32.totalorder %s114, %s115
      %p127 = scmp.eq.s32.totalorder %s28, 1
      %p128 = por %p126, %p127
      %p130 = scmp.ne.s32.totalorder %s115, %s129
      %p131 = scmp.eq.s32.totalorder %s28, 0
      %p132 = por %p130, %p131
      %s134 = sadd.s32 %s133, 1
      %p137 = scmp.eq.s32.totalorder %s22, 1
      %p138 = scmp.ne.s32.totalorder %s133, %s135
      %p139 = scmp.eq.s32.totalorder %s22, 0
      %p140 = por %p138, %p139
      %p141 = scmp.ne.s32.totalorder %s133, %s135
      %p142 = scmp.eq.s32.totalorder %s27, 1
      %p143 = por %p141, %p142
      %p144 = scmp.ne.s32.totalorder %s135, %s136
      %p145 = scmp.eq.s32.totalorder %s27, 0
      %p146 = por %p144, %p145
      %p147 = scmp.ne.s32.totalorder %s135, %s136
      %p148 = scmp.eq.s32.totalorder %s28, 1
      %p149 = por %p147, %p148
      %p151 = scmp.ne.s32.totalorder %s136, %s150
      %p152 = scmp.eq.s32.totalorder %s28, 0
      %p153 = por %p151, %p152
      %s154 = ssub.s32 %s29, %s41
      %s155 = ssub.s32 %s30, %s37
      %s156 = sor.u32 %s154, %s155
      %p157 = scmp.eq.s32.totalorder %s156, 0
      %s159 = sadd.s32 %s158, 1
      %s160 = scalar_select %p157, %s158, %s159
      %p163 = pneg %p157
      %p164 = scmp.eq.s32.totalorder %s22, 1
      %p165 = por %p163, %p164
      %p166 = scmp.ne.s32.totalorder %s158, %s161
      %p167 = scmp.eq.s32.totalorder %s22, 0
      %p168 = por %p166, %p167
      %p169 = scmp.ne.s32.totalorder %s158, %s161
      %p170 = scmp.eq.s32.totalorder %s27, 1
      %p171 = por %p169, %p170
      %p172 = scmp.ne.s32.totalorder %s161, %s162
      %p173 = scmp.eq.s32.totalorder %s27, 0
      %p174 = por %p172, %p173
      %p175 = scmp.ne.s32.totalorder %s161, %s162
      %p176 = scmp.eq.s32.totalorder %s28, 1
      %p177 = por %p175, %p176
      %p179 = scmp.ne.s32.totalorder %s162, %s178
      %p180 = scmp.eq.s32.totalorder %s28, 0
      %p181 = por %p179, %p180
      %s182 = ssub.s32 %s29, %s41
      %s183 = ssub.s32 %s30, %s37
      %s184 = sor.u32 %s182, %s183
      %p185 = scmp.eq.s32.totalorder %s184, 0
      %s187 = sadd.s32 %s186, 1
      %s188 = scalar_select %p185, %s186, %s187
      %p191 = pneg %p185
      %p192 = scmp.eq.s32.totalorder %s22, 1
      %p193 = por %p191, %p192
      %p194 = scmp.ne.s32.totalorder %s186, %s189
      %p195 = scmp.eq.s32.totalorder %s22, 0
      %p196 = por %p194, %p195
      %p197 = scmp.ne.s32.totalorder %s186, %s189
      %p198 = scmp.eq.s32.totalorder %s27, 1
      %p199 = por %p197, %p198
      %p200 = scmp.ne.s32.totalorder %s189, %s190
      %p201 = scmp.eq.s32.totalorder %s27, 0
      %p202 = por %p200, %p201
      %p203 = scmp.ne.s32.totalorder %s189, %s190
      %p204 = scmp.eq.s32.totalorder %s28, 1
      %p205 = por %p203, %p204
      %p207 = scmp.ne.s32.totalorder %s190, %s206
      %p208 = scmp.eq.s32.totalorder %s28, 0
      %p209 = por %p207, %p208
      %p210 = scmp.le.s32.totalorder 1, %s22
      %p211 = scmp.lt.s32.totalorder %s22, 3
      %p212 = pnand %p210, %p211
      %p213 = pneg %p212
      // Predicated region
      $region9: #{tpu_custom_call.1} parent=5 // pred_check
        _
      $region10: #{tpu_custom_call.1} parent=5 // pred_check_branch
        %215 = sbr.rel (%p212) target = $region12
      $region11: #{tpu_custom_call.1} parent=5 // pred_region
        %s216 = ssub.s32 %s22, 1
        // Predicated region
        $region13: #{tpu_custom_call.1} parent=11 // pred_check
          %p217 = pneg %p83
        $region14: #{tpu_custom_call.1} parent=11 // pred_check_branch
          %219 = sbr.rel (%p217) target = $region16
        $region15: #{tpu_custom_call.1} parent=11 // pred_region
          _
        $region16: #{tpu_custom_call.1} parent=11 // pred_fallthru
          _
        // Predicated region
        $region17: #{tpu_custom_call.1} parent=11 // pred_check
          %p220 = pneg %p104
        $region18: #{tpu_custom_call.1} parent=11 // pred_check_branch
          %222 = sbr.rel (%p220) target = $region20
        $region19: #{tpu_custom_call.1} parent=11 // pred_region
          _
        $region20: #{tpu_custom_call.1} parent=11 // pred_fallthru
          _
        // Predicated region
        $region21: #{tpu_custom_call.1} parent=11 // pred_check
          %p223 = pneg %p125
        $region22: #{tpu_custom_call.1} parent=11 // pred_check_branch
          %225 = sbr.rel (%p223) target = $region24
        $region23: #{tpu_custom_call.1} parent=11 // pred_region
          _
        $region24: #{tpu_custom_call.1} parent=11 // pred_fallthru
          _
        // Predicated region
        $region25: #{tpu_custom_call.1} parent=11 // pred_check
          %p226 = pneg %p146
        $region26: #{tpu_custom_call.1} parent=11 // pred_check_branch
          %228 = sbr.rel (%p226) target = $region28
        $region27: #{tpu_custom_call.1} parent=11 // pred_region
          _
        $region28: #{tpu_custom_call.1} parent=11 // pred_fallthru
          _
      $region12: #{tpu_custom_call.1} parent=5 // pred_fallthru
        _
      %p229 = scmp.lt.s32.totalorder %s22, 2
      // Predicated region
      $region29: #{tpu_custom_call.1} parent=5 // pred_check
        %p230 = pneg %p229
      $region30: #{tpu_custom_call.1} parent=5 // pred_check_branch
        %232 = sbr.rel (%p230) target = $region32
      $region31: #{tpu_custom_call.1} parent=5 // pred_region
        // Predicated region
        $region33: #{tpu_custom_call.1} parent=31 // pred_check
          %p233 = pneg %p56
        $region34: #{tpu_custom_call.1} parent=31 // pred_check_branch
          %235 = sbr.rel (%p233) target = $region36
        $region35: #{tpu_custom_call.1} parent=31 // pred_region
          %s236 = sand.u32 %s46, 1
          %s237 = scalar_lea.sflag [#allocation3], %s236
          %s238 = sand.u32 %s46, 1
          %s239 = smul.addr %s238, 8
          %s240 = scalar_lea.vmem [#allocation2], %s239
          %s241 = smul.u32 2, %s30
          %s243 = ssub.s32 128, 128
          %244 = vsyncadd %s237, %s243
          %s245 = smul.addr %s29, 2
          %s246 = sadd.s32 %s241, %s245
          %s247 = smul.addr %s246, 64
          %s248 = scalar_lea.hbm %s0, %s247
          %s250 = sshll.u32 %s240, 4
          %s251 = int_to_ptr.vmem [resolvable:$true] %s250
          %253 = dma.hbm_to_vmem [thread:$0]  %s248, 128, %s251, %s237
        $region36: #{tpu_custom_call.1} parent=31 // pred_fallthru
          _
      $region32: #{tpu_custom_call.1} parent=5 // pred_fallthru
        _
      %p254 = scmp.le.s32.totalorder 1, %s22
      %p255 = scmp.lt.s32.totalorder %s22, 3
      %p256 = pnand %p254, %p255
      %p257 = pneg %p256
      // Predicated region
      $region37: #{tpu_custom_call.1} parent=5 // pred_check
        _
      $region38: #{tpu_custom_call.1} parent=5 // pred_check_branch
        %259 = sbr.rel (%p256) target = $region40
      $region39: #{tpu_custom_call.1} parent=5 // pred_region
        %s260 = ssub.s32 %s22, 1
        %s261 = sand.u32 %s49, 1
        %s262 = scalar_lea.sflag [#allocation3], %s261
        %s263 = sand.u32 %s49, 1
        %s264 = smul.addr %s263, 8
        %s265 = scalar_lea.vmem [#allocation2], %s264
        // Predicated region
        $region41: #{tpu_custom_call.1} parent=39 // pred_check
          %p266 = pneg %p62
        $region42: #{tpu_custom_call.1} parent=39 // pred_check_branch
          %268 = sbr.rel (%p266) target = $region44
        $region43: #{tpu_custom_call.1} parent=39 // pred_region
          %269 = dma.done %s262, 128
        $region44: #{tpu_custom_call.1} parent=39 // pred_fallthru
          _
        %s270 = sand.u32 %s49, 1
        %s271 = scalar_lea.sflag [#allocation3], %s270
        %s272 = sand.u32 %s49, 1
        %s273 = smul.addr %s272, 8
        %s274 = scalar_lea.vmem [#allocation2], %s273
        %p275 = pneg %p62
        %p276 = pneg %p59
        %p277 = pneg %p83
        %p278 = pneg %p80
        %p279 = pneg %p104
        %p280 = pneg %p101
        %p281 = pneg %p125
        %p282 = pneg %p122
        %p283 = pneg %p146
        %p284 = pneg %p143
        %p285 = pneg %p174
        %p286 = pneg %p171
        %s287 = sand.u32 %s161, 1
        %s288 = scalar_lea.sflag [#allocation4], %s287
        %s289 = sand.u32 %s161, 1
        %s290 = smul.addr %s289, 8
        %s291 = scalar_lea.vmem [#allocation5], %s290
        %p292 = pneg %p202
        %p293 = pneg %p199
        %s294 = sand.u32 %s189, 1
        %s295 = scalar_lea.sflag [#allocation7], %s294
        %s296 = sand.u32 %s189, 1
        %s297 = smul.addr %s296, 8
        %s298 = scalar_lea.vmem [#allocation6], %s297
        %s299 = smul.u32 2, %s32
        %s300 = smul.u32 2, %s32
        %s301 = smul.u32 2, %s32
        %v302 = vld [vmem:[%s265] sm:$0xff]
        %v303 = vld [vmem:[%s1] sm:$0xf]
        %v304 = vld [vmem:[%s2] sm:$0xf]
        %v305 = vld [vmem:[%s3] sm:$0xf]
        %307 = vset.pattern.permute.xlu0 0
        %308 = vperm.xlu0 %307, %v305
        %v309 = vpop.permute.xlu0 %308
        %v312 = vcombine.high %v302, %v302
        %vm313 = vcmask 31744
        %v315 = vsel %vm313, %v303, 0
        %vm317 = vcmask 1043456
        %v318 = vsel %vm317, %v302, 0
        %v320 = vsel %vm317, %v312, 0
        %322 = vmatprep.subr.mxu0 %v320
        %323 = vmatpush1.msra.mxu0 %v318
        %324 = vmatprep.subr.mxu0 0.0
        %325 = vmatpush1.msra.mxu0 0.0
        %326 = vmatprep.subr.mxu0 0.0
        %327 = vmatpush1.msra.mxu0 0.0
        %328 = vmatprep.subr.mxu0 0.0
        %329 = vmatpush1.msra.mxu0 0.0
        %330 = vmatprep.subr.mxu0 0.0
        %331 = vmatpush1.msra.mxu0 0.0
        %332 = vmatprep.subr.mxu0 0.0
        %333 = vmatpush1.msra.mxu0 0.0
        %334 = vmatprep.subr.mxu0 0.0
        %335 = vmatpush1.msra.mxu0 0.0
        %336 = vmatprep.subr.mxu0 0.0
        %337 = vmatpush1.msra.mxu0 0.0
        %338 = vmatprep.subr.mxu0 0.0
        %339 = vmatpush1.msra.mxu0 0.0
        %340 = vmatprep.subr.mxu0 0.0
        %341 = vmatpush1.msra.mxu0 0.0
        %342 = vmatprep.subr.mxu0 0.0
        %343 = vmatpush1.msra.mxu0 0.0
        %344 = vmatprep.subr.mxu0 0.0
        %345 = vmatpush1.msra.mxu0 0.0
        %346 = vmatprep.subr.mxu0 0.0
        %347 = vmatpush1.msra.mxu0 0.0
        %348 = vmatprep.subr.mxu0 0.0
        %349 = vmatpush1.msra.mxu0 0.0
        %350 = vmatprep.subr.mxu0 0.0
        %351 = vmatpush1.msra.mxu0 0.0
        %352 = vmatprep.subr.mxu0 0.0
        %353 = vmatpush1.msra.mxu0 0.0
        %354 = vmatprep.subr.mxu0 0.0
        %355 = vmatpush1.msra.mxu0 0.0
        %356 = vmatprep.subr.mxu0 0.0
        %357 = vmatpush1.msra.mxu0 0.0
        %358 = vmatprep.subr.mxu0 0.0
        %359 = vmatpush1.msra.mxu0 0.0
        %360 = vmatprep.subr.mxu0 0.0
        %361 = vmatpush1.msra.mxu0 0.0
        %362 = vmatprep.subr.mxu0 0.0
        %363 = vmatpush1.msra.mxu0 0.0
        %364 = vmatprep.subr.mxu0 0.0
        %365 = vmatpush1.msra.mxu0 0.0
        %366 = vmatprep.subr.mxu0 0.0
        %367 = vmatpush1.msra.mxu0 0.0
        %368 = vmatprep.subr.mxu0 0.0
        %369 = vmatpush1.msra.mxu0 0.0
        %370 = vmatprep.subr.mxu0 0.0
        %371 = vmatpush1.msra.mxu0 0.0
        %372 = vmatprep.subr.mxu0 0.0
        %373 = vmatpush1.msra.mxu0 0.0
        %374 = vmatprep.subr.mxu0 0.0
        %375 = vmatpush1.msra.mxu0 0.0
        %376 = vmatprep.subr.mxu0 0.0
        %377 = vmatpush1.msra.mxu0 0.0
        %378 = vmatprep.subr.mxu0 0.0
        %379 = vmatpush1.msra.mxu0 0.0
        %380 = vmatprep.subr.mxu0 0.0
        %381 = vmatpush1.msra.mxu0 0.0
        %382 = vmatprep.subr.mxu0 0.0
        %383 = vmatpush1.msra.mxu0 0.0
        %384 = vmatprep.subr.mxu0 0.0
        %385 = vmatpush1.msra.mxu0 0.0
        %386 = vmatprep.mubr.f32.mxu0 0.0
        %387 = vmatmul.mubr.f32.gmra.mrb[0].mxu0 %v315
        %v388 = vpop.f32.mrb[0].mxu0
        %v389 = vadd.f32 %v309, %v388
        %v390 = vpop.f32.mrb[0].mxu0
        %v391 = vadd.f32 %v309, %v390
        %392 = vdwg.mxu0
        %v393 = vld [vmem:[%s4] sm:$0xf]
        %395 = vset.pattern.permute.xlu0 0
        %396 = vperm.xlu0 %395, %v393
        %v397 = vpop.permute.xlu0 %396
        %v400 = vsel %vm313, %v304, 0
        %402 = vmatprep.subr.mxu0 %v320
        %403 = vmatpush1.msra.mxu0 %v318
        %404 = vmatprep.subr.mxu0 0.0
        %405 = vmatpush1.msra.mxu0 0.0
        %406 = vmatprep.subr.mxu0 0.0
        %407 = vmatpush1.msra.mxu0 0.0
        %408 = vmatprep.subr.mxu0 0.0
        %409 = vmatpush1.msra.mxu0 0.0
        %410 = vmatprep.subr.mxu0 0.0
        %411 = vmatpush1.msra.mxu0 0.0
        %412 = vmatprep.subr.mxu0 0.0
        %413 = vmatpush1.msra.mxu0 0.0
        %414 = vmatprep.subr.mxu0 0.0
        %415 = vmatpush1.msra.mxu0 0.0
        %416 = vmatprep.subr.mxu0 0.0
        %417 = vmatpush1.msra.mxu0 0.0
        %418 = vmatprep.subr.mxu0 0.0
        %419 = vmatpush1.msra.mxu0 0.0
        %420 = vmatprep.subr.mxu0 0.0
        %421 = vmatpush1.msra.mxu0 0.0
        %422 = vmatprep.subr.mxu0 0.0
        %423 = vmatpush1.msra.mxu0 0.0
        %424 = vmatprep.subr.mxu0 0.0
        %425 = vmatpush1.msra.mxu0 0.0
        %426 = vmatprep.subr.mxu0 0.0
        %427 = vmatpush1.msra.mxu0 0.0
        %428 = vmatprep.subr.mxu0 0.0
        %429 = vmatpush1.msra.mxu0 0.0
        %430 = vmatprep.subr.mxu0 0.0
        %431 = vmatpush1.msra.mxu0 0.0
        %432 = vmatprep.subr.mxu0 0.0
        %433 = vmatpush1.msra.mxu0 0.0
        %434 = vmatprep.subr.mxu0 0.0
        %435 = vmatpush1.msra.mxu0 0.0
        %436 = vmatprep.subr.mxu0 0.0
        %437 = vmatpush1.msra.mxu0 0.0
        %438 = vmatprep.subr.mxu0 0.0
        %439 = vmatpush1.msra.mxu0 0.0
        %440 = vmatprep.subr.mxu0 0.0
        %441 = vmatpush1.msra.mxu0 0.0
        %442 = vmatprep.subr.mxu0 0.0
        %443 = vmatpush1.msra.mxu0 0.0
        %444 = vmatprep.subr.mxu0 0.0
        %445 = vmatpush1.msra.mxu0 0.0
        %446 = vmatprep.subr.mxu0 0.0
        %447 = vmatpush1.msra.mxu0 0.0
        %448 = vmatprep.subr.mxu0 0.0
        %449 = vmatpush1.msra.mxu0 0.0
        %450 = vmatprep.subr.mxu0 0.0
        %451 = vmatpush1.msra.mxu0 0.0
        %452 = vmatprep.subr.mxu0 0.0
        %453 = vmatpush1.msra.mxu0 0.0
        %454 = vmatprep.subr.mxu0 0.0
        %455 = vmatpush1.msra.mxu0 0.0
        %456 = vmatprep.subr.mxu0 0.0
        %457 = vmatpush1.msra.mxu0 0.0
        %458 = vmatprep.subr.mxu0 0.0
        %459 = vmatpush1.msra.mxu0 0.0
        %460 = vmatprep.subr.mxu0 0.0
        %461 = vmatpush1.msra.mxu0 0.0
        %462 = vmatprep.subr.mxu0 0.0
        %463 = vmatpush1.msra.mxu0 0.0
        %464 = vmatprep.subr.mxu0 0.0
        %465 = vmatpush1.msra.mxu0 0.0
        %466 = vmatprep.mubr.f32.mxu0 0.0
        %467 = vmatmul.mubr.f32.gmra.mrb[0].mxu0 %v400
        %v468 = vpop.f32.mrb[0].mxu0
        %v469 = vadd.f32 %v397, %v468
        %v470 = vpop.f32.mrb[0].mxu0
        %v471 = vadd.f32 %v397, %v470
        %472 = vdwg.mxu0
        %v475 = vcombine.low %v389, %v391
        %477 = vst [vmem:[%s291] sm:$0xff] %v475
        %v480 = vcombine.low %v469, %v471
        %482 = vst [vmem:[%s298] sm:$0xff] %v480
        %s483 = sand.u32 %s161, 1
        %s484 = scalar_lea.sflag [#allocation4], %s483
        %s485 = sand.u32 %s161, 1
        %s486 = smul.addr %s485, 8
        %s487 = scalar_lea.vmem [#allocation5], %s486
        %s488 = sand.u32 %s189, 1
        %s489 = scalar_lea.sflag [#allocation7], %s488
        %s490 = sand.u32 %s189, 1
        %s491 = smul.addr %s490, 8
        %s492 = scalar_lea.vmem [#allocation6], %s491
        // Predicated region
        $region45: #{tpu_custom_call.1} parent=39 // pred_check
          %p493 = pneg %p171
        $region46: #{tpu_custom_call.1} parent=39 // pred_check_branch
          %495 = sbr.rel (%p493) target = $region48
        $region47: #{tpu_custom_call.1} parent=39 // pred_region
          %s496 = smul.u32 2, %s32
          %s498 = ssub.s32 128, 128
          %499 = vsyncadd %s484, %s498
          %s500 = smul.addr %s31, 2
          %s501 = sadd.s32 %s496, %s500
          %s502 = smul.addr %s501, 64
          %s503 = scalar_lea.hbm %s5, %s502
          %s505 = sshll.u32 %s487, 4
          %s506 = int_to_ptr.vmem [resolvable:$true] %s505
          %508 = dma.vmem_to_hbm [thread:$0]  %s506, 128, %s503, %s484
        $region48: #{tpu_custom_call.1} parent=39 // pred_fallthru
          _
        // Predicated region
        $region49: #{tpu_custom_call.1} parent=39 // pred_check
          %p509 = pneg %p199
        $region50: #{tpu_custom_call.1} parent=39 // pred_check_branch
          %511 = sbr.rel (%p509) target = $region52
        $region51: #{tpu_custom_call.1} parent=39 // pred_region
          %s512 = smul.u32 2, %s32
          %s514 = ssub.s32 128, 128
          %515 = vsyncadd %s489, %s514
          %s516 = smul.addr %s31, 2
          %s517 = sadd.s32 %s512, %s516
          %s518 = smul.addr %s517, 64
          %s519 = scalar_lea.hbm %s6, %s518
          %s521 = sshll.u32 %s492, 4
          %s522 = int_to_ptr.vmem [resolvable:$true] %s521
          %524 = dma.vmem_to_hbm [thread:$0]  %s522, 128, %s519, %s489
        $region52: #{tpu_custom_call.1} parent=39 // pred_fallthru
          _
      $region40: #{tpu_custom_call.1} parent=5 // pred_fallthru
        _
      %p525 = scmp.le.s32.totalorder 2, %s22
      // Predicated region
      $region53: #{tpu_custom_call.1} parent=5 // pred_check
        %p526 = pneg %p525
      $region54: #{tpu_custom_call.1} parent=5 // pred_check_branch
        %528 = sbr.rel (%p526) target = $region56
      $region55: #{tpu_custom_call.1} parent=5 // pred_region
        %s529 = ssub.s32 %s22, 2
        // Predicated region
        $region57: #{tpu_custom_call.1} parent=55 // pred_check
          %p530 = pneg %p177
        $region58: #{tpu_custom_call.1} parent=55 // pred_check_branch
          %532 = sbr.rel (%p530) target = $region60
        $region59: #{tpu_custom_call.1} parent=55 // pred_region
          %s533 = sand.u32 %s162, 1
          %s534 = scalar_lea.sflag [#allocation4], %s533
          %s535 = sand.u32 %s162, 1
          %s536 = smul.addr %s535, 8
          %s537 = scalar_lea.vmem [#allocation5], %s536
          %538 = dma.done %s534, 128
        $region60: #{tpu_custom_call.1} parent=55 // pred_fallthru
          _
        // Predicated region
        $region61: #{tpu_custom_call.1} parent=55 // pred_check
          %p539 = pneg %p205
        $region62: #{tpu_custom_call.1} parent=55 // pred_check_branch
          %541 = sbr.rel (%p539) target = $region64
        $region63: #{tpu_custom_call.1} parent=55 // pred_region
          %s542 = sand.u32 %s190, 1
          %s543 = scalar_lea.sflag [#allocation7], %s542
          %s544 = sand.u32 %s190, 1
          %s545 = smul.addr %s544, 8
          %s546 = scalar_lea.vmem [#allocation6], %s545
          %547 = dma.done %s543, 128
        $region64: #{tpu_custom_call.1} parent=55 // pred_fallthru
          _
      $region56: #{tpu_custom_call.1} parent=5 // pred_fallthru
        _
    $region6: #{tpu_custom_call.1} parent=1 // loop_footer
      %s26 = sadd.s32 1, %s22
    $region7: #{tpu_custom_call.1} parent=1 // loop_footer_branch
      %21 = sbr.rel target = $region3
    $region8: #{tpu_custom_call.1} parent=1 // loop_exit
      _
    %548 = vsyncpa [#allocation3], 1
    %s549 = scalar_lea.sflag [#allocation3], 1
    %550 = vsyncpa %s549, 1
    %551 = vsyncpa [#allocation4], 1
    %s552 = scalar_lea.sflag [#allocation4], 1
    %553 = vsyncpa %s552, 1
    %554 = vsyncpa [#allocation7], 1
    %s555 = scalar_lea.sflag [#allocation7], 1
    %556 = vsyncpa %s555, 1

</llo_original>
